<compile_context>
chip_gen: v7x
topology: tpu7x:2x2x1
jax: 0.10.0
libtpu: 0.0.40
codegen_flags: <defaults>
</compile_context>

<pallas_src>
import functools

import jax
import jax.numpy as jnp
from jax.experimental import pallas as pl
from jax.experimental.pallas import tpu as pltpu

_LANES = 128
_SUBLANES = 8


def _sublane_multiple(dtype) -> int:
    # Packed-sublane tile height: 8 rows for 32-bit, 16 for 16-bit, 32 for 8-bit.
    return max(_SUBLANES, 32 // jnp.dtype(dtype).itemsize)


def _dice_sums_kernel(pred_ref, target_ref, inter_ref, denom_ref, *,
                      rows_per_block, total_rows, blocks_per_split,
                      first_masked_block, needs_mask):
    c = pl.program_id(1)          # core-split index (parallel)
    j = pl.program_id(2)          # row-block index within the split (reduction)

    @pl.when(j == 0)
    def _():
        inter_ref[...] = jnp.zeros_like(inter_ref)
        denom_ref[...] = jnp.zeros_like(denom_ref)

    p = pred_ref[...].astype(jnp.float32)      # (rows_per_block, 128)
    t = target_ref[...].astype(jnp.float32)

    groups = rows_per_block // _SUBLANES

    def _accumulate(pv, tv):
        # (rows, 128) -> (groups, 8, 128) matches the native vreg tiling, so
        # the axis-0 sums are pure full-width VPU adds (no per-step XLU work).
        inter_ref[...] += jnp.sum((pv * tv).reshape(groups, _SUBLANES, _LANES),
                                  axis=0)
        denom_ref[...] += jnp.sum((pv + tv).reshape(groups, _SUBLANES, _LANES),
                                  axis=0)

    if needs_mask:
        global_block = c * blocks_per_split + j
        is_tail = global_block >= first_masked_block

        @pl.when(jnp.logical_not(is_tail))
        def _():
            _accumulate(p, t)

        @pl.when(is_tail)
        def _():
            # Mask is applied to p and t BEFORE the multiply so garbage from a
            # partial / clamped DMA can never reach the sums.  (rows, 1) iota
            # broadcasts across lanes.
            row = jax.lax.broadcasted_iota(jnp.int32, (rows_per_block, 1), 0)
            valid = (row + global_block * rows_per_block) < total_rows
            _accumulate(jnp.where(valid, p, 0.0), jnp.where(valid, t, 0.0))
    else:
        _accumulate(p, t)


def dice_loss(pred, target, smooth: float = 1.0, *,
              block_bytes_per_input: int = 4 * 1024 * 1024,
              num_core_splits=None,
              max_rows_per_block=None):
    """Pallas TPU implementation of DiceLoss.forward. Returns a scalar float32."""
    B = pred.shape[0]
    pred2 = pred.reshape(B, -1)        # same as torch .view (row-major, free)
    target2 = target.reshape(B, -1)
    if pred2.shape != target2.shape:
        raise ValueError(
            "flattened pred/target must match (C must be 1), got "
            f"{pred2.shape} vs {target2.shape}")
    N = pred2.shape[1]

    row_mult = max(_sublane_multiple(pred2.dtype), _sublane_multiple(target2.dtype))
    itemsize = max(jnp.dtype(pred2.dtype).itemsize,
                   jnp.dtype(target2.dtype).itemsize)

    # View the flattened axis as (rows, 128).  Zero-pad only if N is not a
    # multiple of 128 or smaller than one packed tile -- exact (zeros do not
    # change any of the sums) and never hit for typical image dims.
    padded_n = max(pl.cdiv(N, _LANES) * _LANES, row_mult * _LANES)
    if padded_n != N:
        pad = padded_n - N
        pred2 = jnp.pad(pred2, ((0, 0), (0, pad)))
        target2 = jnp.pad(target2, ((0, 0), (0, pad)))
    rows = padded_n // _LANES
    pred3 = pred2.reshape(B, rows, _LANES)      # free (row-major) reshape
    target3 = target2.reshape(B, rows, _LANES)

    # Byte-budgeted row tile: constant DMA size regardless of dtype, rounded to
    # the packed-sublane tile so narrow dtypes stay layout-aligned.
    budget_rows = max(row_mult, block_bytes_per_input // (_LANES * itemsize))
    if max_rows_per_block is not None:
        budget_rows = min(budget_rows, max(row_mult, max_rows_per_block))
    rows_per_block = min(budget_rows, rows)
    rows_per_block = max(row_mult, (rows_per_block // row_mult) * row_mult)
    n_row_blocks = pl.cdiv(rows, rows_per_block)

    # Second parallel axis so both v7x TensorCores stay busy when B is 1 / odd.
    if num_core_splits is None:
        num_core_splits = 2 if (B % 2 == 1 and n_row_blocks >= 2) else 1
    n_splits = max(1, min(num_core_splits, n_row_blocks))
    blocks_per_split = pl.cdiv(n_row_blocks, n_splits)

    # Masking is needed if the logical grid over-covers the row range (partial
    # last block and/or split over-coverage).
    needs_mask = (n_splits * blocks_per_split * rows_per_block) != rows
    first_masked_block = (n_row_blocks - 1 if (rows % rows_per_block) != 0
                          else n_row_blocks)

    kernel = functools.partial(
        _dice_sums_kernel,
        rows_per_block=rows_per_block,
        total_rows=rows,
        blocks_per_split=blocks_per_split,
        first_masked_block=first_masked_block,
        needs_mask=needs_mask,
    )

    last_block = n_row_blocks - 1

    def in_map(b, c, j):
        # Clamp so logical blocks past the end (only when the split over-covers
        # the row range) re-read the last block; the kernel masks them to zero.
        blk = jnp.minimum(c * blocks_per_split + j, last_block)
        return (b, blk, 0)

    inter, denom = pl.pallas_call(
        kernel,
        out_shape=(
            jax.ShapeDtypeStruct((B, n_splits, _SUBLANES, _LANES), jnp.float32),
            jax.ShapeDtypeStruct((B, n_splits, _SUBLANES, _LANES), jnp.float32),
        ),
        grid_spec=pltpu.PrefetchScalarGridSpec(
            num_scalar_prefetch=0,
            grid=(B, n_splits, blocks_per_split),
            in_specs=[
                pl.BlockSpec((None, rows_per_block, _LANES), in_map),
                pl.BlockSpec((None, rows_per_block, _LANES), in_map),
            ],
            out_specs=[
                pl.BlockSpec((None, None, _SUBLANES, _LANES),
                             lambda b, c, j: (b, c, 0, 0)),
                pl.BlockSpec((None, None, _SUBLANES, _LANES),
                             lambda b, c, j: (b, c, 0, 0)),
            ],
        ),
        compiler_params=pltpu.CompilerParams(
            # B and the core-split axis shard across TensorCores (v7x megacore);
            # the row-block axis is the sequential reduction.
            dimension_semantics=("parallel", "parallel", "arbitrary"),
            vmem_limit_bytes=32 * 1024 * 1024,
        ),
    )(pred3, target3)

    # Tiny epilogue in plain JAX: collapse the per-(batch, split) (8,128)
    # partial sums and do the dice / mean combine.
    inter_sum = jnp.sum(inter, axis=(1, 2, 3))      # (B,)
    denom_sum = jnp.sum(denom, axis=(1, 2, 3))      # (B,)  == sum(p) + sum(t)
    dice = (2.0 * inter_sum + smooth) / (denom_sum + smooth)
    return 1.0 - jnp.mean(dice)


def dice_loss_ref(pred, target, smooth: float = 1.0):
    B = pred.shape[0]
    p = pred.reshape(B, -1).astype(jnp.float32)
    t = target.reshape(B, -1).astype(jnp.float32)
    inter = jnp.sum(p * t, axis=1)
    dice = (2.0 * inter + smooth) / (jnp.sum(p, axis=1) + jnp.sum(t, axis=1) + smooth)
    return 1.0 - jnp.mean(dice)


if __name__ == "__main__":
    key = jax.random.PRNGKey(0)

    # (shape, target_dtype, pred_dtype, forced max_rows_per_block)
    cases = [
        # Default path: 18 rows -> 2 row blocks, masked partial tail, B even.
        ((2, 1, 48, 48), jnp.float32, jnp.float32, None),
        # Tiny-input zero-pad path (256 elems padded up to one 8x128 tile).
        ((2, 1, 16, 16), jnp.float32, jnp.float32, None),
        # Narrow-dtype streaming path: bf16 pred + int8 target, row_mult = 32.
        ((2, 1, 32, 64), jnp.int8, jnp.bfloat16, None),
        # Odd B -> core-split axis active, with masked tail + clamped OOB block.
        ((3, 1, 48, 48), jnp.float32, jnp.float32, 8),
        # B == 1 -> core-split axis active, exact coverage (no mask).
        ((1, 1, 64, 64), jnp.float32, jnp.float32, 8),
    ]

    for (shape, t_dtype, p_dtype, max_rpb) in cases:
        B, C = shape[0], shape[1]
        spatial = shape[2:]
        key, k1, k2 = jax.random.split(key, 3)
        pred = jax.nn.sigmoid(
            jax.random.normal(k1, shape, dtype=jnp.float32)).astype(p_dtype)
        target = (jax.random.uniform(k2, (B,) + spatial) > 0.5).astype(t_dtype)

        loss = jax.block_until_ready(
            dice_loss(pred, target, smooth=1.0, max_rows_per_block=max_rpb))
        ref = jax.block_until_ready(dice_loss_ref(pred, target, smooth=1.0))
        assert jnp.allclose(loss, ref, atol=1e-4, rtol=1e-4), (loss, ref, shape)

    print("KERNEL_OK")
</pallas_src>

<mosaic_0001>
module attributes {stable_mosaic.version = 11 : i64} {
  func.func @_dice_sums_kernel(%arg0: i32, %arg1: i32, %arg2: i32, %arg3: memref<1x16x128xf32, #tpu.memory_space<vmem>>, %arg4: memref<1x16x128xf32, #tpu.memory_space<vmem>>, %arg5: memref<1x1x8x128xf32, #tpu.memory_space<vmem>>, %arg6: memref<1x1x8x128xf32, #tpu.memory_space<vmem>>) attributes {dimension_semantics = [#tpu.dimension_semantics<parallel>, #tpu.dimension_semantics<parallel>, #tpu.dimension_semantics<arbitrary>], iteration_bounds = array<i64: 2, 1, 2>, scalar_prefetch = 0 : i64, scratch_operands = 0 : i64, tpu.core_type = #tpu.core_type<tc>, window_params = [{transform_indices = @transform_0, window_bounds = array<i64: 1, 16, 128>}, {transform_indices = @transform_1, window_bounds = array<i64: 1, 16, 128>}, {transform_indices = @transform_2, window_bounds = array<i64: 1, 1, 8, 128>}, {transform_indices = @transform_3, window_bounds = array<i64: 1, 1, 8, 128>}]} {
    %c0_i32 = arith.constant 0 : i32
    %0 = arith.cmpi eq, %arg2, %c0_i32 : i32
    %1 = arith.extui %0 : i1 to i32
    %c0_i32_0 = arith.constant 0 : i32
    %2 = arith.cmpi ne, %1, %c0_i32_0 : i32
    scf.if %2 {
      %cst = arith.constant 0.000000e+00 : f32
      %15 = vector.broadcast %cst : f32 to vector<8x128xf32>
      %c0_8 = arith.constant 0 : index
      %c0_9 = arith.constant 0 : index
      %c0_10 = arith.constant 0 : index
      %c0_11 = arith.constant 0 : index
      %16 = vector.load %arg5[%c0_8, %c0_9, %c0_10, %c0_11] : memref<1x1x8x128xf32, #tpu.memory_space<vmem>>, vector<1x1x8x128xf32>
      %17 = vector.shape_cast %16 : vector<1x1x8x128xf32> to vector<8x128xf32>
      %18 = vector.shape_cast %15 : vector<8x128xf32> to vector<1x1x8x128xf32>
      tpu.vector_store %arg5[%c0_8, %c0_9, %c0_10, %c0_11], %18 {strides = array<i32>} : memref<1x1x8x128xf32, #tpu.memory_space<vmem>>, vector<1x1x8x128xf32>,
      %cst_12 = arith.constant 0.000000e+00 : f32
      %19 = vector.broadcast %cst_12 : f32 to vector<8x128xf32>
      %c0_13 = arith.constant 0 : index
      %c0_14 = arith.constant 0 : index
      %c0_15 = arith.constant 0 : index
      %c0_16 = arith.constant 0 : index
      %20 = vector.load %arg6[%c0_13, %c0_14, %c0_15, %c0_16] : memref<1x1x8x128xf32, #tpu.memory_space<vmem>>, vector<1x1x8x128xf32>
      %21 = vector.shape_cast %20 : vector<1x1x8x128xf32> to vector<8x128xf32>
      %22 = vector.shape_cast %19 : vector<8x128xf32> to vector<1x1x8x128xf32>
      tpu.vector_store %arg6[%c0_13, %c0_14, %c0_15, %c0_16], %22 {strides = array<i32>} : memref<1x1x8x128xf32, #tpu.memory_space<vmem>>, vector<1x1x8x128xf32>,
    } else {
    }
    %c0 = arith.constant 0 : index
    %c0_1 = arith.constant 0 : index
    %c0_2 = arith.constant 0 : index
    %3 = vector.load %arg3[%c0, %c0_1, %c0_2] : memref<1x16x128xf32, #tpu.memory_space<vmem>>, vector<1x16x128xf32>
    %4 = vector.shape_cast %3 : vector<1x16x128xf32> to vector<16x128xf32>
    %c0_3 = arith.constant 0 : index
    %c0_4 = arith.constant 0 : index
    %c0_5 = arith.constant 0 : index
    %5 = vector.load %arg4[%c0_3, %c0_4, %c0_5] : memref<1x16x128xf32, #tpu.memory_space<vmem>>, vector<1x16x128xf32>
    %6 = vector.shape_cast %5 : vector<1x16x128xf32> to vector<16x128xf32>
    %c2_i32 = arith.constant 2 : i32
    %7 = arith.muli %arg1, %c2_i32 : i32
    %8 = arith.addi %7, %arg2 : i32
    %c1_i32 = arith.constant 1 : i32
    %9 = arith.cmpi sge, %8, %c1_i32 : i32
    %true = arith.constant true
    %10 = arith.xori %9, %true : i1
    %11 = arith.extui %10 : i1 to i32
    %c0_i32_6 = arith.constant 0 : i32
    %12 = arith.cmpi ne, %11, %c0_i32_6 : i32
    scf.if %12 {
      %c0_8 = arith.constant 0 : index
      %c0_9 = arith.constant 0 : index
      %c0_10 = arith.constant 0 : index
      %c0_11 = arith.constant 0 : index
      %15 = vector.load %arg5[%c0_8, %c0_9, %c0_10, %c0_11] : memref<1x1x8x128xf32, #tpu.memory_space<vmem>>, vector<1x1x8x128xf32>
      %16 = vector.shape_cast %15 : vector<1x1x8x128xf32> to vector<8x128xf32>
      %17 = arith.mulf %4, %6 : vector<16x128xf32>
      %18 = vector.shape_cast %17 : vector<16x128xf32> to vector<2x8x128xf32>
      %cst = arith.constant dense<0.000000e+00> : vector<8x128xf32>
      %19 = vector.multi_reduction <add>, %18, %cst [0] : vector<2x8x128xf32> to vector<8x128xf32>
      %20 = arith.addf %16, %19 : vector<8x128xf32>
      %c0_12 = arith.constant 0 : index
      %c0_13 = arith.constant 0 : index
      %c0_14 = arith.constant 0 : index
      %c0_15 = arith.constant 0 : index
      %21 = vector.load %arg5[%c0_12, %c0_13, %c0_14, %c0_15] : memref<1x1x8x128xf32, #tpu.memory_space<vmem>>, vector<1x1x8x128xf32>
      %22 = vector.shape_cast %21 : vector<1x1x8x128xf32> to vector<8x128xf32>
      %23 = vector.shape_cast %20 : vector<8x128xf32> to vector<1x1x8x128xf32>
      tpu.vector_store %arg5[%c0_12, %c0_13, %c0_14, %c0_15], %23 {strides = array<i32>} : memref<1x1x8x128xf32, #tpu.memory_space<vmem>>, vector<1x1x8x128xf32>,
      %c0_16 = arith.constant 0 : index
      %c0_17 = arith.constant 0 : index
      %c0_18 = arith.constant 0 : index
      %c0_19 = arith.constant 0 : index
      %24 = vector.load %arg6[%c0_16, %c0_17, %c0_18, %c0_19] : memref<1x1x8x128xf32, #tpu.memory_space<vmem>>, vector<1x1x8x128xf32>
      %25 = vector.shape_cast %24 : vector<1x1x8x128xf32> to vector<8x128xf32>
      %26 = arith.addf %4, %6 : vector<16x128xf32>
      %27 = vector.shape_cast %26 : vector<16x128xf32> to vector<2x8x128xf32>
      %cst_20 = arith.constant dense<0.000000e+00> : vector<8x128xf32>
      %28 = vector.multi_reduction <add>, %27, %cst_20 [0] : vector<2x8x128xf32> to vector<8x128xf32>
      %29 = arith.addf %25, %28 : vector<8x128xf32>
      %c0_21 = arith.constant 0 : index
      %c0_22 = arith.constant 0 : index
      %c0_23 = arith.constant 0 : index
      %c0_24 = arith.constant 0 : index
      %30 = vector.load %arg6[%c0_21, %c0_22, %c0_23, %c0_24] : memref<1x1x8x128xf32, #tpu.memory_space<vmem>>, vector<1x1x8x128xf32>
      %31 = vector.shape_cast %30 : vector<1x1x8x128xf32> to vector<8x128xf32>
      %32 = vector.shape_cast %29 : vector<8x128xf32> to vector<1x1x8x128xf32>
      tpu.vector_store %arg6[%c0_21, %c0_22, %c0_23, %c0_24], %32 {strides = array<i32>} : memref<1x1x8x128xf32, #tpu.memory_space<vmem>>, vector<1x1x8x128xf32>,
    } else {
    }
    %13 = arith.extui %9 : i1 to i32
    %c0_i32_7 = arith.constant 0 : i32
    %14 = arith.cmpi ne, %13, %c0_i32_7 : i32
    scf.if %14 {
      %15 = tpu.iota {dimensions = array<i32: 0>} : vector<16x1xi32>
      %c16_i32 = arith.constant 16 : i32
      %16 = arith.muli %8, %c16_i32 : i32
      %17 = vector.broadcast %16 : i32 to vector<16x1xi32>
      %18 = arith.addi %15, %17 : vector<16x1xi32>
      %c18_i32 = arith.constant 18 : i32
      %19 = vector.broadcast %c18_i32 : i32 to vector<16x1xi32>
      %20 = arith.cmpi slt, %18, %19 : vector<16x1xi32>
      %cst = arith.constant 0.000000e+00 : f32
      %21 = vector.shape_cast %20 : vector<16x1xi1> to vector<16x1xi1>
      %22 = vector.broadcast %21 : vector<16x1xi1> to vector<16x128xi1>
      %23 = vector.broadcast %cst : f32 to vector<16x128xf32>
      %24 = arith.select %22, %4, %23 : vector<16x128xi1>, vector<16x128xf32>
      %cst_8 = arith.constant 0.000000e+00 : f32
      %25 = vector.shape_cast %20 : vector<16x1xi1> to vector<16x1xi1>
      %26 = vector.broadcast %25 : vector<16x1xi1> to vector<16x128xi1>
      %27 = vector.broadcast %cst_8 : f32 to vector<16x128xf32>
      %28 = arith.select %26, %6, %27 : vector<16x128xi1>, vector<16x128xf32>
      %c0_9 = arith.constant 0 : index
      %c0_10 = arith.constant 0 : index
      %c0_11 = arith.constant 0 : index
      %c0_12 = arith.constant 0 : index
      %29 = vector.load %arg5[%c0_9, %c0_10, %c0_11, %c0_12] : memref<1x1x8x128xf32, #tpu.memory_space<vmem>>, vector<1x1x8x128xf32>
      %30 = vector.shape_cast %29 : vector<1x1x8x128xf32> to vector<8x128xf32>
      %31 = arith.mulf %24, %28 : vector<16x128xf32>
      %32 = vector.shape_cast %31 : vector<16x128xf32> to vector<2x8x128xf32>
      %cst_13 = arith.constant dense<0.000000e+00> : vector<8x128xf32>
      %33 = vector.multi_reduction <add>, %32, %cst_13 [0] : vector<2x8x128xf32> to vector<8x128xf32>
      %34 = arith.addf %30, %33 : vector<8x128xf32>
      %c0_14 = arith.constant 0 : index
      %c0_15 = arith.constant 0 : index
      %c0_16 = arith.constant 0 : index
      %c0_17 = arith.constant 0 : index
      %35 = vector.load %arg5[%c0_14, %c0_15, %c0_16, %c0_17] : memref<1x1x8x128xf32, #tpu.memory_space<vmem>>, vector<1x1x8x128xf32>
      %36 = vector.shape_cast %35 : vector<1x1x8x128xf32> to vector<8x128xf32>
      %37 = vector.shape_cast %34 : vector<8x128xf32> to vector<1x1x8x128xf32>
      tpu.vector_store %arg5[%c0_14, %c0_15, %c0_16, %c0_17], %37 {strides = array<i32>} : memref<1x1x8x128xf32, #tpu.memory_space<vmem>>, vector<1x1x8x128xf32>,
      %c0_18 = arith.constant 0 : index
      %c0_19 = arith.constant 0 : index
      %c0_20 = arith.constant 0 : index
      %c0_21 = arith.constant 0 : index
      %38 = vector.load %arg6[%c0_18, %c0_19, %c0_20, %c0_21] : memref<1x1x8x128xf32, #tpu.memory_space<vmem>>, vector<1x1x8x128xf32>
      %39 = vector.shape_cast %38 : vector<1x1x8x128xf32> to vector<8x128xf32>
      %40 = arith.addf %24, %28 : vector<16x128xf32>
      %41 = vector.shape_cast %40 : vector<16x128xf32> to vector<2x8x128xf32>
      %cst_22 = arith.constant dense<0.000000e+00> : vector<8x128xf32>
      %42 = vector.multi_reduction <add>, %41, %cst_22 [0] : vector<2x8x128xf32> to vector<8x128xf32>
      %43 = arith.addf %39, %42 : vector<8x128xf32>
      %c0_23 = arith.constant 0 : index
      %c0_24 = arith.constant 0 : index
      %c0_25 = arith.constant 0 : index
      %c0_26 = arith.constant 0 : index
      %44 = vector.load %arg6[%c0_23, %c0_24, %c0_25, %c0_26] : memref<1x1x8x128xf32, #tpu.memory_space<vmem>>, vector<1x1x8x128xf32>
      %45 = vector.shape_cast %44 : vector<1x1x8x128xf32> to vector<8x128xf32>
      %46 = vector.shape_cast %43 : vector<8x128xf32> to vector<1x1x8x128xf32>
      tpu.vector_store %arg6[%c0_23, %c0_24, %c0_25, %c0_26], %46 {strides = array<i32>} : memref<1x1x8x128xf32, #tpu.memory_space<vmem>>, vector<1x1x8x128xf32>,
    } else {
    }
    return
  }
  func.func @transform_0(%arg0: i32, %arg1: i32, %arg2: i32) -> (i32, i32, i32) {
    %c2_i32 = arith.constant 2 : i32
    %0 = arith.muli %arg1, %c2_i32 : i32
    %1 = arith.addi %0, %arg2 : i32
    %c1_i32 = arith.constant 1 : i32
    %2 = arith.minsi %1, %c1_i32 : i32
    %c0_i32 = arith.constant 0 : i32
    %c0_i32_0 = arith.constant 0 : i32
    return %arg0, %2, %c0_i32 : i32, i32, i32
  }
  func.func @transform_1(%arg0: i32, %arg1: i32, %arg2: i32) -> (i32, i32, i32) {
    %c2_i32 = arith.constant 2 : i32
    %0 = arith.muli %arg1, %c2_i32 : i32
    %1 = arith.addi %0, %arg2 : i32
    %c1_i32 = arith.constant 1 : i32
    %2 = arith.minsi %1, %c1_i32 : i32
    %c0_i32 = arith.constant 0 : i32
    %c0_i32_0 = arith.constant 0 : i32
    return %arg0, %2, %c0_i32 : i32, i32, i32
  }
  func.func @transform_2(%arg0: i32, %arg1: i32, %arg2: i32) -> (i32, i32, i32, i32) {
    %c0_i32 = arith.constant 0 : i32
    %c0_i32_0 = arith.constant 0 : i32
    %c0_i32_1 = arith.constant 0 : i32
    return %arg0, %arg1, %c0_i32, %c0_i32_0 : i32, i32, i32, i32
  }
  func.func @transform_3(%arg0: i32, %arg1: i32, %arg2: i32) -> (i32, i32, i32, i32) {
    %c0_i32 = arith.constant 0 : i32
    %c0_i32_0 = arith.constant 0 : i32
    %c0_i32_1 = arith.constant 0 : i32
    return %arg0, %arg1, %c0_i32, %c0_i32_0 : i32, i32, i32, i32
  }
}

</mosaic_0001>

<llo_original>
// kernel: tpu_custom_call.1
$region0: #{tpu_custom_call.1}
  #allocation0 [shape = 'u32[]', space=smem, size = 0x4, offset = 0x4, fixed_abs, tag = 'smem constant byte address 0x4 - core index']
  #allocation1 [shape = 'u32[144,128]{1,0:T(1,128)}', space=vmem, size = 0x12000, scoped, tag = 'internal scratch']
  %s0 = inlined_call_operand.vmem [shape: f32[2,18,128], index: 0, kind: input, shape index: {}]
  %s1 = inlined_call_operand.vmem [shape: f32[2,18,128], index: 1, kind: input, shape index: {}]
  %s2 = inlined_call_operand.hbm [shape: f32[2,1,8,128], index: 2, kind: output, shape index: {0}]
  %s3 = inlined_call_operand.hbm [shape: f32[2,1,8,128], index: 3, kind: output, shape index: {1}]
  %4 = xla_tuple %s2, %s3
  %s5 = sld [smem:[#allocation0]]
  $region61: #{tpu_custom_call.1} parent=0
    _
  %s7 = ssub.s32 1, %s5
  %s8 = scalar_select 0, %s7, %s5
  $region1: #{tpu_custom_call.1} parent=0
    #allocation2 [shape = 'u8[8192]{0}', space=vmem, size = 0x2000, scoped, tag = 'output window, operand 0']
    #allocation3 [shape = 's32[2]{0}', space=sflag, size = 0x8, scoped, tag = 'scoped memory for tpu_custom_call.1']
    #allocation4 [shape = 'u8[8192]{0}', space=vmem, size = 0x2000, scoped, tag = 'output window, operand 1']
    #allocation5 [shape = 's32[2]{0}', space=sflag, size = 0x8, scoped, tag = 'scoped memory for tpu_custom_call.1']
    %9 = vsyncpa [#allocation3], 0
    %s10 = scalar_lea.sflag [#allocation3], 1
    %11 = vsyncpa %s10, 0
    %12 = vsyncpa [#allocation5], 0
    %s13 = scalar_lea.sflag [#allocation5], 1
    %14 = vsyncpa %s13, 0
    loop: start=0, step=1, limit=6
    $region2: #{tpu_custom_call.1} parent=1 // loop_pre_header
      _
    $region3: #{tpu_custom_call.1} parent=1 // loop_header
      %s16 = sphi 0, %s20
      %p17 = scmp.ge.s32.totalorder %s16, 6
      %s23 = sphi 0, %s42
      %s24 = sphi 0, %s38
      %s25 = sphi 0, %s34
      %s26 = sphi 0, %s23
      %s27 = sphi 0, %s24
      %s28 = sphi 0, %s25
      %s29 = sphi 0, %s26
      %s30 = sphi 0, %s27
      %s31 = sphi 0, %s28
      %s55 = sphi 0, %s57
      %s58 = sphi 0, %s55
      %s59 = sphi 0, %s58
      %s75 = sphi 0, %s59
      %s91 = sphi 0, %s93
      %s94 = sphi 0, %s91
      %s95 = sphi 0, %s94
      %s111 = sphi 0, %s95
      %s119 = sphi 0, %s121
      %s122 = sphi 0, %s119
      %s123 = sphi 0, %s122
      %s139 = sphi 0, %s123
      %s147 = sphi 0, %s149
      %s150 = sphi 0, %s147
      %s151 = sphi 0, %s150
      %s167 = sphi 0, %s151
    $region4: #{tpu_custom_call.1} parent=1 // loop_header_branch
      %19 = sbr.rel (%p17) target = $region8
    $region5: #{tpu_custom_call.1} parent=1 // loop_body
      %s21 = ssub.s32 %s16, 1
      %s22 = ssub.s32 %s16, 2
      %s32 = sadd.s32 1, %s25
      %p33 = scmp.ge.s32.totalorder %s32, 2
      %s34 = scalar_select %p33, 0, %s32
      %s35 = sadd.s32 1, %s24
      %s36 = scalar_select %p33, %s35, %s24
      %p37 = scmp.ge.s32.totalorder %s36, 1
      %s38 = scalar_select %p37, 0, %s36
      %s39 = sadd.s32 1, %s23
      %s40 = scalar_select %p37, %s39, %s23
      %p41 = scmp.ge.s32.totalorder %s40, 2
      %s42 = scalar_select %p41, 0, %s40
      %s43 = smul.u32 %s24, 2
      %s44 = sadd.s32 %s43, %s25
      %p45 = scmp.lt.s32.totalorder %s44, 1
      %s46 = scalar_select %p45, %s44, 1
      %s47 = smul.u32 %s38, 2
      %s48 = sadd.s32 %s47, %s34
      %p49 = scmp.lt.s32.totalorder %s48, 1
      %s50 = scalar_select %p49, %s48, 1
      %s51 = ssub.s32 %s23, %s42
      %s52 = ssub.s32 %s46, %s50
      %s53 = sor.u32 %s51, %s52
      %p54 = scmp.eq.s32.totalorder %s53, 0
      %s56 = sadd.s32 %s55, 1
      %s57 = scalar_select %p54, %s55, %s56
      %p60 = pneg %p54
      %p61 = scmp.eq.s32.totalorder %s16, 3
      %p62 = por %p60, %p61
      %p63 = scmp.ne.s32.totalorder %s55, %s58
      %p64 = scmp.eq.s32.totalorder %s16, 0
      %p65 = por %p63, %p64
      %p66 = scmp.ne.s32.totalorder %s55, %s58
      %p67 = scmp.eq.s32.totalorder %s21, 3
      %p68 = por %p66, %p67
      %p69 = scmp.ne.s32.totalorder %s58, %s59
      %p70 = scmp.eq.s32.totalorder %s21, 0
      %p71 = por %p69, %p70
      %p72 = scmp.ne.s32.totalorder %s58, %s59
      %p73 = scmp.eq.s32.totalorder %s22, 3
      %p74 = por %p72, %p73
      %p76 = scmp.ne.s32.totalorder %s59, %s75
      %p77 = scmp.eq.s32.totalorder %s22, 0
      %p78 = por %p76, %p77
      %s79 = smul.u32 %s24, 2
      %s80 = sadd.s32 %s79, %s25
      %p81 = scmp.lt.s32.totalorder %s80, 1
      %s82 = scalar_select %p81, %s80, 1
      %s83 = smul.u32 %s38, 2
      %s84 = sadd.s32 %s83, %s34
      %p85 = scmp.lt.s32.totalorder %s84, 1
      %s86 = scalar_select %p85, %s84, 1
      %s87 = ssub.s32 %s23, %s42
      %s88 = ssub.s32 %s82, %s86
      %s89 = sor.u32 %s87, %s88
      %p90 = scmp.eq.s32.totalorder %s89, 0
      %s92 = sadd.s32 %s91, 1
      %s93 = scalar_select %p90, %s91, %s92
      %p96 = pneg %p90
      %p97 = scmp.eq.s32.totalorder %s16, 3
      %p98 = por %p96, %p97
      %p99 = scmp.ne.s32.totalorder %s91, %s94
      %p100 = scmp.eq.s32.totalorder %s16, 0
      %p101 = por %p99, %p100
      %p102 = scmp.ne.s32.totalorder %s91, %s94
      %p103 = scmp.eq.s32.totalorder %s21, 3
      %p104 = por %p102, %p103
      %p105 = scmp.ne.s32.totalorder %s94, %s95
      %p106 = scmp.eq.s32.totalorder %s21, 0
      %p107 = por %p105, %p106
      %p108 = scmp.ne.s32.totalorder %s94, %s95
      %p109 = scmp.eq.s32.totalorder %s22, 3
      %p110 = por %p108, %p109
      %p112 = scmp.ne.s32.totalorder %s95, %s111
      %p113 = scmp.eq.s32.totalorder %s22, 0
      %p114 = por %p112, %p113
      %s115 = ssub.s32 %s23, %s42
      %s116 = ssub.s32 %s24, %s38
      %s117 = sor.u32 %s115, %s116
      %p118 = scmp.eq.s32.totalorder %s117, 0
      %s120 = sadd.s32 %s119, 1
      %s121 = scalar_select %p118, %s119, %s120
      %p124 = pneg %p118
      %p125 = scmp.eq.s32.totalorder %s16, 3
      %p126 = por %p124, %p125
      %p127 = scmp.ne.s32.totalorder %s119, %s122
      %p128 = scmp.eq.s32.totalorder %s16, 0
      %p129 = por %p127, %p128
      %p130 = scmp.ne.s32.totalorder %s119, %s122
      %p131 = scmp.eq.s32.totalorder %s21, 3
      %p132 = por %p130, %p131
      %p133 = scmp.ne.s32.totalorder %s122, %s123
      %p134 = scmp.eq.s32.totalorder %s21, 0
      %p135 = por %p133, %p134
      %p136 = scmp.ne.s32.totalorder %s122, %s123
      %p137 = scmp.eq.s32.totalorder %s22, 3
      %p138 = por %p136, %p137
      %p140 = scmp.ne.s32.totalorder %s123, %s139
      %p141 = scmp.eq.s32.totalorder %s22, 0
      %p142 = por %p140, %p141
      %s143 = ssub.s32 %s23, %s42
      %s144 = ssub.s32 %s24, %s38
      %s145 = sor.u32 %s143, %s144
      %p146 = scmp.eq.s32.totalorder %s145, 0
      %s148 = sadd.s32 %s147, 1
      %s149 = scalar_select %p146, %s147, %s148
      %p152 = pneg %p146
      %p153 = scmp.eq.s32.totalorder %s16, 3
      %p154 = por %p152, %p153
      %p155 = scmp.ne.s32.totalorder %s147, %s150
      %p156 = scmp.eq.s32.totalorder %s16, 0
      %p157 = por %p155, %p156
      %p158 = scmp.ne.s32.totalorder %s147, %s150
      %p159 = scmp.eq.s32.totalorder %s21, 3
      %p160 = por %p158, %p159
      %p161 = scmp.ne.s32.totalorder %s150, %s151
      %p162 = scmp.eq.s32.totalorder %s21, 0
      %p163 = por %p161, %p162
      %p164 = scmp.ne.s32.totalorder %s150, %s151
      %p165 = scmp.eq.s32.totalorder %s22, 3
      %p166 = por %p164, %p165
      %p168 = scmp.ne.s32.totalorder %s151, %s167
      %p169 = scmp.eq.s32.totalorder %s22, 0
      %p170 = por %p168, %p169
      %p171 = scmp.le.s32.totalorder 1, %s16
      %p172 = scmp.lt.s32.totalorder %s16, 5
      %p173 = pnand %p171, %p172
      %p174 = pneg %p173
      // Predicated region
      $region9: #{tpu_custom_call.1} parent=5 // pred_check
        _
      $region10: #{tpu_custom_call.1} parent=5 // pred_check_branch
        %176 = sbr.rel (%p173) target = $region12
      $region11: #{tpu_custom_call.1} parent=5 // pred_region
        %s177 = ssub.s32 %s16, 1
      $region12: #{tpu_custom_call.1} parent=5 // pred_fallthru
        _
      %p178 = scmp.lt.s32.totalorder %s16, 4
      // Predicated region
      $region13: #{tpu_custom_call.1} parent=5 // pred_check
        %p179 = pneg %p178
      $region14: #{tpu_custom_call.1} parent=5 // pred_check_branch
        %181 = sbr.rel (%p179) target = $region16
      $region15: #{tpu_custom_call.1} parent=5 // pred_region
        // Predicated region
        $region17: #{tpu_custom_call.1} parent=15 // pred_check
          %p182 = pneg %p65
        $region18: #{tpu_custom_call.1} parent=15 // pred_check_branch
          %184 = sbr.rel (%p182) target = $region20
        $region19: #{tpu_custom_call.1} parent=15 // pred_region
          %s185 = smul.u32 %s24, 2
          %s186 = sadd.s32 %s185, %s25
          %p187 = scmp.lt.s32.totalorder %s186, 1
          %s188 = scalar_select %p187, %s186, 1
          %s189 = smul.u32 2, %s188
          %s190 = ssub.s32 3, %s189
          %p191 = scmp.lt.s32.totalorder %s190, 2
          %s192 = scalar_select %p191, %s190, 2
          %s193 = smul.u32 128, %s192
          %p194 = scmp.lt.s32.totalorder %s23, 1
          %s195 = scalar_select %p194, %s23, 1
          %p196 = scmp.lt.s32.totalorder %s189, 2
          %s197 = scalar_select %p196, %s189, 2
          %s198 = smul.addr %s195, 3
          %s199 = sadd.s32 %s197, %s198
          %s200 = smul.addr %s199, 8
          %s201 = scalar_lea.vmem %s0, %s200
          %s202 = smul.u32 %s24, 2
          %s203 = sadd.s32 %s202, %s25
          %p204 = scmp.lt.s32.totalorder %s203, 1
          %s205 = scalar_select %p204, %s203, 1
          %s206 = smul.u32 2, %s205
          %s207 = ssub.s32 3, %s206
          %p208 = scmp.lt.s32.totalorder %s207, 2
          %s209 = scalar_select %p208, %s207, 2
          %s210 = smul.u32 128, %s209
        $region20: #{tpu_custom_call.1} parent=15 // pred_fallthru
          _
        // Predicated region
        $region21: #{tpu_custom_call.1} parent=15 // pred_check
          %p211 = pneg %p101
        $region22: #{tpu_custom_call.1} parent=15 // pred_check_branch
          %213 = sbr.rel (%p211) target = $region24
        $region23: #{tpu_custom_call.1} parent=15 // pred_region
          %s214 = smul.u32 %s24, 2
          %s215 = sadd.s32 %s214, %s25
          %p216 = scmp.lt.s32.totalorder %s215, 1
          %s217 = scalar_select %p216, %s215, 1
          %s218 = smul.u32 2, %s217
          %s219 = ssub.s32 3, %s218
          %p220 = scmp.lt.s32.totalorder %s219, 2
          %s221 = scalar_select %p220, %s219, 2
          %s222 = smul.u32 128, %s221
          %p223 = scmp.lt.s32.totalorder %s23, 1
          %s224 = scalar_select %p223, %s23, 1
          %p225 = scmp.lt.s32.totalorder %s218, 2
          %s226 = scalar_select %p225, %s218, 2
          %s227 = smul.addr %s224, 3
          %s228 = sadd.s32 %s226, %s227
          %s229 = smul.addr %s228, 8
          %s230 = scalar_lea.vmem %s1, %s229
          %s231 = smul.u32 %s24, 2
          %s232 = sadd.s32 %s231, %s25
          %p233 = scmp.lt.s32.totalorder %s232, 1
          %s234 = scalar_select %p233, %s232, 1
          %s235 = smul.u32 2, %s234
          %s236 = ssub.s32 3, %s235
          %p237 = scmp.lt.s32.totalorder %s236, 2
          %s238 = scalar_select %p237, %s236, 2
          %s239 = smul.u32 128, %s238
        $region24: #{tpu_custom_call.1} parent=15 // pred_fallthru
          _
      $region16: #{tpu_custom_call.1} parent=5 // pred_fallthru
        _
      %p240 = scmp.le.s32.totalorder 1, %s16
      %p241 = scmp.lt.s32.totalorder %s16, 5
      %p242 = pnand %p240, %p241
      %p243 = pneg %p242
      // Predicated region
      $region25: #{tpu_custom_call.1} parent=5 // pred_check
        _
      $region26: #{tpu_custom_call.1} parent=5 // pred_check_branch
        %245 = sbr.rel (%p242) target = $region28
      $region27: #{tpu_custom_call.1} parent=5 // pred_region
        %s246 = ssub.s32 %s16, 1
        %s247 = smul.u32 %s27, 2
        %s248 = sadd.s32 %s247, %s28
        %p249 = scmp.lt.s32.totalorder %s248, 1
        %s250 = scalar_select %p249, %s248, 1
        %s251 = smul.u32 2, %s250
        %s252 = ssub.s32 3, %s251
        %p253 = scmp.lt.s32.totalorder %s252, 2
        %s254 = scalar_select %p253, %s252, 2
        %s255 = smul.u32 128, %s254
        %p256 = scmp.lt.s32.totalorder %s26, 1
        %s257 = scalar_select %p256, %s26, 1
        %p258 = scmp.lt.s32.totalorder %s251, 2
        %s259 = scalar_select %p258, %s251, 2
        %s260 = smul.addr %s257, 3
        %s261 = sadd.s32 %s259, %s260
        %s262 = smul.addr %s261, 8
        %s263 = scalar_lea.vmem %s0, %s262
        %p264 = pneg %p71
        %p265 = pneg %p68
        %s266 = smul.u32 %s27, 2
        %s267 = sadd.s32 %s266, %s28
        %p268 = scmp.lt.s32.totalorder %s267, 1
        %s269 = scalar_select %p268, %s267, 1
        %s270 = smul.u32 2, %s269
        %s271 = ssub.s32 3, %s270
        %p272 = scmp.lt.s32.totalorder %s271, 2
        %s273 = scalar_select %p272, %s271, 2
        %s274 = smul.u32 128, %s273
        %p275 = scmp.lt.s32.totalorder %s26, 1
        %s276 = scalar_select %p275, %s26, 1
        %p277 = scmp.lt.s32.totalorder %s270, 2
        %s278 = scalar_select %p277, %s270, 2
        %s279 = smul.addr %s276, 3
        %s280 = sadd.s32 %s278, %s279
        %s281 = smul.addr %s280, 8
        %s282 = scalar_lea.vmem %s1, %s281
        %p283 = pneg %p107
        %p284 = pneg %p104
        %p285 = pneg %p135
        %p286 = pneg %p132
        %s287 = sand.u32 %s122, 1
        %s288 = scalar_lea.sflag [#allocation3], %s287
        %s289 = sand.u32 %s122, 1
        %s290 = smul.addr %s289, 8
        %s291 = scalar_lea.vmem [#allocation2], %s290
        %p292 = pneg %p163
        %p293 = pneg %p160
        %s294 = sand.u32 %s150, 1
        %s295 = scalar_lea.sflag [#allocation5], %s294
        %s296 = sand.u32 %s150, 1
        %s297 = smul.addr %s296, 8
        %s298 = scalar_lea.vmem [#allocation4], %s297
        %s299 = smul.u32 %s27, 2
        %s300 = sadd.s32 %s299, %s28
        %p301 = scmp.lt.s32.totalorder %s300, 1
        %s302 = scalar_select %p301, %s300, 1
        %s303 = smul.u32 2, %s302
        %s304 = ssub.s32 3, %s303
        %p305 = scmp.lt.s32.totalorder %s304, 2
        %s306 = scalar_select %p305, %s304, 2
        %s307 = smul.u32 128, %s306
        %p308 = scmp.lt.s32.totalorder %s26, 1
        %s309 = scalar_select %p308, %s26, 1
        %p310 = scmp.lt.s32.totalorder %s303, 2
        %s311 = scalar_select %p310, %s303, 2
        %s312 = smul.addr %s309, 3
        %s313 = sadd.s32 %s311, %s312
        %s314 = smul.addr %s313, 8
        %s315 = scalar_lea.vmem %s0, %s314
        %s316 = smul.u32 %s27, 2
        %s317 = sadd.s32 %s316, %s28
        %p318 = scmp.lt.s32.totalorder %s317, 1
        %s319 = scalar_select %p318, %s317, 1
        %s320 = smul.u32 2, %s319
        %s321 = ssub.s32 3, %s320
        %p322 = scmp.lt.s32.totalorder %s321, 2
        %s323 = scalar_select %p322, %s321, 2
        %s324 = smul.u32 128, %s323
        %s325 = smul.u32 %s27, 2
        %s326 = sadd.s32 %s325, %s28
        %p327 = scmp.lt.s32.totalorder %s326, 1
        %s328 = scalar_select %p327, %s326, 1
        %s329 = smul.u32 2, %s328
        %s330 = ssub.s32 3, %s329
        %p331 = scmp.lt.s32.totalorder %s330, 2
        %s332 = scalar_select %p331, %s330, 2
        %s333 = smul.u32 128, %s332
        %p334 = scmp.lt.s32.totalorder %s26, 1
        %s335 = scalar_select %p334, %s26, 1
        %p336 = scmp.lt.s32.totalorder %s329, 2
        %s337 = scalar_select %p336, %s329, 2
        %s338 = smul.addr %s335, 3
        %s339 = sadd.s32 %s337, %s338
        %s340 = smul.addr %s339, 8
        %s341 = scalar_lea.vmem %s1, %s340
        %s342 = smul.u32 %s27, 2
        %s343 = sadd.s32 %s342, %s28
        %p344 = scmp.lt.s32.totalorder %s343, 1
        %s345 = scalar_select %p344, %s343, 1
        %s346 = smul.u32 2, %s345
        %s347 = ssub.s32 3, %s346
        %p348 = scmp.lt.s32.totalorder %s347, 2
        %s349 = scalar_select %p348, %s347, 2
        %s350 = smul.u32 128, %s349
        %p351 = scmp.eq.s32.totalorder %s28, 0
        // Predicated region
        $region29: #{tpu_custom_call.1} parent=27 // pred_check
          %p352 = pneg %p351
        $region30: #{tpu_custom_call.1} parent=27 // pred_check_branch
          %354 = sbr.rel (%p352) target = $region32
        $region31: #{tpu_custom_call.1} parent=27 // pred_region
          %355 = vst [vmem:[%s291] sm:$0xff] 0.0
          %356 = vst [vmem:[%s298] sm:$0xff] 0.0
        $region32: #{tpu_custom_call.1} parent=27 // pred_fallthru
          _
        %v357 = vld [vmem:[%s315] sm:$0xff]
        %v358 = vld [vmem:[%s315 + $0x8] sm:$0xff]
        %v359 = vld [vmem:[%s341] sm:$0xff]
        %v360 = vld [vmem:[%s341 + $0x8] sm:$0xff]
        %s361 = smul.u32 %s27, 2
        %s362 = sadd.s32 %s361, %s28
        %p363 = scmp.ge.s32.totalorder %s362, 1
        %p364 = scmp.lt.s32.totalorder %s362, 1
        // Predicated region
        $region33: #{tpu_custom_call.1} parent=27 // pred_check
          %p365 = pneg %p364
        $region34: #{tpu_custom_call.1} parent=27 // pred_check_branch
          %367 = sbr.rel (%p365) target = $region36
        $region35: #{tpu_custom_call.1} parent=27 // pred_region
          %v368 = vld [vmem:[%s291] sm:$0xff]
          %v369 = vmul.f32 %v357, %v359
          %v370 = vmul.f32 %v358, %v360
          %v371 = vadd.f32 %v369, %v370
          %v372 = vadd.f32 %v368, %v371
          %373 = vst [vmem:[%s291] sm:$0xff] %v372
          %v374 = vld [vmem:[%s298] sm:$0xff]
          %v375 = vadd.f32 %v357, %v359
          %v376 = vadd.f32 %v358, %v360
          %v377 = vadd.f32 %v375, %v376
          %v378 = vadd.f32 %v374, %v377
          %379 = vst [vmem:[%s298] sm:$0xff] %v378
        $region36: #{tpu_custom_call.1} parent=27 // pred_fallthru
          _
        // Predicated region
        $region37: #{tpu_custom_call.1} parent=27 // pred_check
          %p380 = pneg %p363
        $region38: #{tpu_custom_call.1} parent=27 // pred_check_branch
          %382 = sbr.rel (%p380) target = $region40
        $region39: #{tpu_custom_call.1} parent=27 // pred_region
          %v383 = vlaneseq
          %v384 = vshrl.u32 %v383, 7
          %v385 = vadd.s32 %v384, 8
          %s386 = smul.u32 %s362, 16
          %v387 = vstv %s386
          %v388 = vadd.s32 %v384, %v387
          %v389 = vadd.s32 %v385, %v387
          %vm390 = vcmp.lt.s32.totalorder %v388, 18
          %vm391 = vcmp.lt.s32.totalorder %v389, 18
          %v392 = vsel %vm390, 1, 0
          %v393 = vsel %vm391, 1, 0
          %vm394 = vcmp.eq.s32.totalorder %v392, 1
          %vm395 = vcmp.eq.s32.totalorder %v393, 1
          %v396 = vsel %vm394, %v357, 0.0
          %v397 = vsel %vm395, %v358, 0.0
          %v398 = vsel %vm394, %v359, 0.0
          %v399 = vsel %vm395, %v360, 0.0
          %v400 = vld [vmem:[%s291] sm:$0xff]
          %v401 = vmul.f32 %v396, %v398
          %v402 = vmul.f32 %v397, %v399
          %v403 = vadd.f32 %v401, %v402
          %v404 = vadd.f32 %v400, %v403
          %405 = vst [vmem:[%s291] sm:$0xff] %v404
          %v406 = vld [vmem:[%s298] sm:$0xff]
          %v407 = vadd.f32 %v396, %v398
          %v408 = vadd.f32 %v397, %v399
          %v409 = vadd.f32 %v407, %v408
          %v410 = vadd.f32 %v406, %v409
          %411 = vst [vmem:[%s298] sm:$0xff] %v410
        $region40: #{tpu_custom_call.1} parent=27 // pred_fallthru
          _
        %s412 = sand.u32 %s122, 1
        %s413 = scalar_lea.sflag [#allocation3], %s412
        %s414 = sand.u32 %s122, 1
        %s415 = smul.addr %s414, 8
        %s416 = scalar_lea.vmem [#allocation2], %s415
        %s417 = sand.u32 %s150, 1
        %s418 = scalar_lea.sflag [#allocation5], %s417
        %s419 = sand.u32 %s150, 1
        %s420 = smul.addr %s419, 8
        %s421 = scalar_lea.vmem [#allocation4], %s420
        // Predicated region
        $region41: #{tpu_custom_call.1} parent=27 // pred_check
          %p422 = pneg %p132
        $region42: #{tpu_custom_call.1} parent=27 // pred_check_branch
          %424 = sbr.rel (%p422) target = $region44
        $region43: #{tpu_custom_call.1} parent=27 // pred_region
          %s426 = ssub.s32 128, 128
          %427 = vsyncadd %s413, %s426
          %s428 = sadd.s32 %s27, %s26
          %s429 = smul.addr %s428, 128
          %s430 = scalar_lea.hbm %s2, %s429
          %s432 = sshll.u32 %s416, 4
          %s433 = int_to_ptr.vmem [resolvable:$true] %s432
          %435 = dma.vmem_to_hbm [thread:$0]  %s433, 128, %s430, %s413
        $region44: #{tpu_custom_call.1} parent=27 // pred_fallthru
          _
        // Predicated region
        $region45: #{tpu_custom_call.1} parent=27 // pred_check
          %p436 = pneg %p160
        $region46: #{tpu_custom_call.1} parent=27 // pred_check_branch
          %438 = sbr.rel (%p436) target = $region48
        $region47: #{tpu_custom_call.1} parent=27 // pred_region
          %s440 = ssub.s32 128, 128
          %441 = vsyncadd %s418, %s440
          %s442 = sadd.s32 %s27, %s26
          %s443 = smul.addr %s442, 128
          %s444 = scalar_lea.hbm %s3, %s443
          %s446 = sshll.u32 %s421, 4
          %s447 = int_to_ptr.vmem [resolvable:$true] %s446
          %449 = dma.vmem_to_hbm [thread:$0]  %s447, 128, %s444, %s418
        $region48: #{tpu_custom_call.1} parent=27 // pred_fallthru
          _
      $region28: #{tpu_custom_call.1} parent=5 // pred_fallthru
        _
      %p450 = scmp.le.s32.totalorder 2, %s16
      // Predicated region
      $region49: #{tpu_custom_call.1} parent=5 // pred_check
        %p451 = pneg %p450
      $region50: #{tpu_custom_call.1} parent=5 // pred_check_branch
        %453 = sbr.rel (%p451) target = $region52
      $region51: #{tpu_custom_call.1} parent=5 // pred_region
        %s454 = ssub.s32 %s16, 2
        // Predicated region
        $region53: #{tpu_custom_call.1} parent=51 // pred_check
          %p455 = pneg %p138
        $region54: #{tpu_custom_call.1} parent=51 // pred_check_branch
          %457 = sbr.rel (%p455) target = $region56
        $region55: #{tpu_custom_call.1} parent=51 // pred_region
          %s458 = sand.u32 %s123, 1
          %s459 = scalar_lea.sflag [#allocation3], %s458
          %s460 = sand.u32 %s123, 1
          %s461 = smul.addr %s460, 8
          %s462 = scalar_lea.vmem [#allocation2], %s461
          %463 = dma.done %s459, 128
        $region56: #{tpu_custom_call.1} parent=51 // pred_fallthru
          _
        // Predicated region
        $region57: #{tpu_custom_call.1} parent=51 // pred_check
          %p464 = pneg %p166
        $region58: #{tpu_custom_call.1} parent=51 // pred_check_branch
          %466 = sbr.rel (%p464) target = $region60
        $region59: #{tpu_custom_call.1} parent=51 // pred_region
          %s467 = sand.u32 %s151, 1
          %s468 = scalar_lea.sflag [#allocation5], %s467
          %s469 = sand.u32 %s151, 1
          %s470 = smul.addr %s469, 8
          %s471 = scalar_lea.vmem [#allocation4], %s470
          %472 = dma.done %s468, 128
        $region60: #{tpu_custom_call.1} parent=51 // pred_fallthru
          _
      $region52: #{tpu_custom_call.1} parent=5 // pred_fallthru
        _
    $region6: #{tpu_custom_call.1} parent=1 // loop_footer
      %s20 = sadd.s32 1, %s16
    $region7: #{tpu_custom_call.1} parent=1 // loop_footer_branch
      %15 = sbr.rel target = $region3
    $region8: #{tpu_custom_call.1} parent=1 // loop_exit
      _
    %473 = vsyncpa [#allocation3], 1
    %s474 = scalar_lea.sflag [#allocation3], 1
    %475 = vsyncpa %s474, 1
    %476 = vsyncpa [#allocation5], 1
    %s477 = scalar_lea.sflag [#allocation5], 1
    %478 = vsyncpa %s477, 1

</llo_original>
